<compile_context>
chip_gen: v7x
topology: tpu7x:2x2x1
jax: 0.10.0
libtpu: 0.0.40
codegen_flags: <defaults>
</compile_context>

<pallas_src>
import functools

import jax
import jax.numpy as jnp
from jax.experimental import pallas as pl
from jax.experimental.pallas import tpu as pltpu

_LANE = 128
_SUBLANE = 8
_NEG_SLOPE = 0.2


def _round_up(x: int, m: int) -> int:
    return (x + m - 1) // m * m


def _make_disc_kernel(num_hidden: int, negative_slope: float = _NEG_SLOPE):
    """Fused MLP kernel: num_hidden (Linear+LeakyReLU) blocks + final Linear.

    refs = [x_tile, w1, b1, ..., w_last, b_last, out_tile]; everything f32,
    already padded to lane-aligned widths by the wrapper.
    """

    def kernel(*refs):
        x_ref = refs[0]
        out_ref = refs[-1]
        p = refs[1:-1]

        h = x_ref[...]  # already f32; no redundant cast in-kernel
        for i in range(num_hidden):
            w = p[2 * i][...]
            b = p[2 * i + 1][...]
            h = jnp.dot(h, w, preferred_element_type=jnp.float32) + b
            # LeakyReLU(0.2): single vmul + vmax per element.
            h = jnp.maximum(h, negative_slope * h)
            # Dropout(0.5): eval-mode identity (see TODO above).
        w = p[2 * num_hidden][...]
        b = p[2 * num_hidden + 1][...]
        # Final Linear padded to a lane-dense 128-wide output (col 0 is real).
        out_ref[...] = jnp.dot(h, w, preferred_element_type=jnp.float32) + b

    return kernel


def init_discriminator_params(key, input_dim, discriminator_dim, pac=10):
    """Deterministic synthetic parameters matching nn.Linear shapes.

    Weights are stored transposed relative to PyTorch: (in_features, out_features).
    Biases are stored as (1, out_features) for clean 2-D broadcasting on TPU.
    """
    dims_in = [input_dim * pac] + list(discriminator_dim)
    dims_out = list(discriminator_dim) + [1]
    params = []
    for din, dout in zip(dims_in, dims_out):
        kw, kb, key = jax.random.split(key, 3)
        bound = 1.0 / float(din) ** 0.5
        w = jax.random.uniform(kw, (din, dout), jnp.float32, -bound, bound)
        b = jax.random.uniform(kb, (1, dout), jnp.float32, -bound, bound)
        params += [w, b]
    return params


@functools.partial(jax.jit, static_argnames=("input_dim", "discriminator_dim", "pac"))
def discriminator_forward(x, params, *, input_dim, discriminator_dim, pac=10):
    """Pallas forward of the CTGAN Discriminator.

    x: (B, input_dim), B % pac == 0.  Returns (B // pac, 1) float32.
    """
    B = x.shape[0]
    assert B % pac == 0
    pacdim = input_dim * pac
    rows = B // pac

    # Glue: the pac-view reshape stays in plain JAX; cast once here.
    x2 = x.reshape(rows, pacdim).astype(jnp.float32)

    # ---- Pad feature dims to lane multiples (zero padding is exact) ----
    k_pad = _round_up(pacdim, _LANE)
    dims_pad = [_round_up(d, _LANE) for d in discriminator_dim]
    out_pad = _LANE  # lane-dense final output; column 0 carries the result

    dims_in = [pacdim] + list(discriminator_dim)
    dims_out = list(discriminator_dim) + [1]
    dims_in_p = [k_pad] + dims_pad
    dims_out_p = dims_pad + [out_pad]

    padded_params = []
    for idx, (din, dout, dinp, doutp) in enumerate(
        zip(dims_in, dims_out, dims_in_p, dims_out_p)
    ):
        w = params[2 * idx]
        b = params[2 * idx + 1]
        w_p = jnp.zeros((dinp, doutp), jnp.float32).at[:din, :dout].set(w)
        b_p = jnp.zeros((1, doutp), jnp.float32).at[:, :dout].set(b)
        padded_params += [w_p, b_p]

    # ---- Row tile sized against v7x VMEM (64 MiB phys, 32 MiB scoped) ----
    weight_bytes = sum(4 * (di * do + do) for di, do in zip(dims_in_p, dims_out_p))
    max_feat = max([k_pad] + dims_pad + [out_pad])
    vmem_budget = 24 * 1024 * 1024  # leave headroom under the 32 MiB limit
    tile_rows = 1024
    while tile_rows > _SUBLANE:
        need = (
            weight_bytes
            + 2 * tile_rows * k_pad * 4      # double-buffered x tile
            + 2 * tile_rows * out_pad * 4    # double-buffered out tile
            + 2 * tile_rows * max_feat * 4   # live intermediate activations
        )
        if need <= vmem_budget:
            break
        tile_rows //= 2
    tile_rows = max(min(tile_rows, _round_up(rows, _SUBLANE)), _SUBLANE)

    rows_pad = _round_up(rows, tile_rows)
    x2p = jnp.zeros((rows_pad, k_pad), jnp.float32).at[:rows, :pacdim].set(x2)

    num_hidden = len(discriminator_dim)
    kernel = _make_disc_kernel(num_hidden)

    grid = (rows_pad // tile_rows,)
    in_specs = [pl.BlockSpec((tile_rows, k_pad), lambda i: (i, 0))]
    for dinp, doutp in zip(dims_in_p, dims_out_p):
        # Weights/biases: same block every grid step -> VMEM-resident.
        in_specs.append(pl.BlockSpec((dinp, doutp), lambda i: (0, 0)))
        in_specs.append(pl.BlockSpec((1, doutp), lambda i: (0, 0)))
    out_specs = pl.BlockSpec((tile_rows, out_pad), lambda i: (i, 0))

    flops = 2 * rows_pad * sum(di * do for di, do in zip(dims_in_p, dims_out_p))
    bytes_accessed = 4 * (rows_pad * k_pad + rows_pad * out_pad) + weight_bytes
    cost = pl.CostEstimate(
        flops=flops, transcendentals=0, bytes_accessed=bytes_accessed
    )

    out_p = pl.pallas_call(
        kernel,
        out_shape=jax.ShapeDtypeStruct((rows_pad, out_pad), jnp.float32),
        grid=grid,
        in_specs=in_specs,
        out_specs=out_specs,
        compiler_params=pltpu.CompilerParams(
            dimension_semantics=("parallel",),
            vmem_limit_bytes=32 * 1024 * 1024,
        ),
        cost_estimate=cost,
    )(x2p, *padded_params)

    # Drop padded rows / padded output columns.
    return out_p[:rows, 0:1]


def _reference_forward(x, params, input_dim, discriminator_dim, pac=10):
    """Pure-JAX reference (eval-mode dropout) for verification."""
    rows = x.shape[0] // pac
    h = x.reshape(rows, input_dim * pac).astype(jnp.float32)
    num_hidden = len(discriminator_dim)
    for i in range(num_hidden):
        w, b = params[2 * i], params[2 * i + 1]
        h = h @ w + b
        h = jnp.where(h > 0, h, _NEG_SLOPE * h)
    w, b = params[2 * num_hidden], params[2 * num_hidden + 1]
    return h @ w + b


if __name__ == "__main__":
    input_dim = 4
    discriminator_dim = (32, 32)
    pac = 10
    batch = 2 * pac  # 20 samples -> 2 pac-groups

    key = jax.random.PRNGKey(0)
    kx, kp = jax.random.split(key)
    x = jax.random.normal(kx, (batch, input_dim), jnp.float32)
    params = init_discriminator_params(kp, input_dim, discriminator_dim, pac=pac)

    out = discriminator_forward(
        x, params, input_dim=input_dim, discriminator_dim=discriminator_dim, pac=pac
    )
    out = jax.block_until_ready(out)

    ref = _reference_forward(x, params, input_dim, discriminator_dim, pac=pac)
    assert out.shape == (batch // pac, 1), out.shape
    assert jnp.allclose(out, ref, atol=1e-4, rtol=1e-4), (out, ref)

    print("KERNEL_OK")
</pallas_src>

<mosaic_0001>
module attributes {stable_mosaic.version = 11 : i64} {
  func.func @kernel(%arg0: i32, %arg1: memref<8x128xf32, #tpu.memory_space<vmem>>, %arg2: memref<128x128xf32, #tpu.memory_space<vmem>>, %arg3: memref<1x128xf32, #tpu.memory_space<vmem>>, %arg4: memref<128x128xf32, #tpu.memory_space<vmem>>, %arg5: memref<1x128xf32, #tpu.memory_space<vmem>>, %arg6: memref<128x128xf32, #tpu.memory_space<vmem>>, %arg7: memref<1x128xf32, #tpu.memory_space<vmem>>, %arg8: memref<8x128xf32, #tpu.memory_space<vmem>>) attributes {dimension_semantics = [#tpu.dimension_semantics<parallel>], iteration_bounds = array<i64: 1>, scalar_prefetch = 0 : i64, scratch_operands = 0 : i64, tpu.core_type = #tpu.core_type<tc>, window_params = [{transform_indices = @transform_0, window_bounds = array<i64: 8, 128>}, {pipeline_mode = #tpu.pipeline_mode<synchronous>, transform_indices = @transform_1, window_bounds = array<i64: 128, 128>}, {pipeline_mode = #tpu.pipeline_mode<synchronous>, transform_indices = @transform_2, window_bounds = array<i64: 1, 128>}, {pipeline_mode = #tpu.pipeline_mode<synchronous>, transform_indices = @transform_3, window_bounds = array<i64: 128, 128>}, {pipeline_mode = #tpu.pipeline_mode<synchronous>, transform_indices = @transform_4, window_bounds = array<i64: 1, 128>}, {pipeline_mode = #tpu.pipeline_mode<synchronous>, transform_indices = @transform_5, window_bounds = array<i64: 128, 128>}, {pipeline_mode = #tpu.pipeline_mode<synchronous>, transform_indices = @transform_6, window_bounds = array<i64: 1, 128>}, {transform_indices = @transform_7, window_bounds = array<i64: 8, 128>}]} {
    %c0 = arith.constant 0 : index
    %c0_0 = arith.constant 0 : index
    %0 = vector.load %arg1[%c0, %c0_0] : memref<8x128xf32, #tpu.memory_space<vmem>>, vector<8x128xf32>
    %c0_1 = arith.constant 0 : index
    %c0_2 = arith.constant 0 : index
    %1 = vector.load %arg2[%c0_1, %c0_2] : memref<128x128xf32, #tpu.memory_space<vmem>>, vector<128x128xf32>
    %c0_3 = arith.constant 0 : index
    %c0_4 = arith.constant 0 : index
    %2 = vector.load %arg3[%c0_3, %c0_4] : memref<1x128xf32, #tpu.memory_space<vmem>>, vector<1x128xf32>
    %cst = arith.constant dense<0.000000e+00> : vector<8x128xf32>
    %3 = tpu.matmul %0, %1, %cst {dimension_numbers = #tpu.dot_dimension_numbers<[1], [0], [0], [1], [0, 0, 1, 1], [], []>} : vector<8x128xf32>, vector<128x128xf32>, vector<8x128xf32> -> vector<8x128xf32>
    %4 = vector.broadcast %2 : vector<1x128xf32> to vector<8x128xf32>
    %5 = arith.addf %3, %4 : vector<8x128xf32>
    %cst_5 = arith.constant 2.000000e-01 : f32
    %6 = vector.broadcast %cst_5 : f32 to vector<8x128xf32>
    %7 = arith.mulf %6, %5 : vector<8x128xf32>
    %8 = arith.maximumf %5, %7 : vector<8x128xf32>
    %c0_6 = arith.constant 0 : index
    %c0_7 = arith.constant 0 : index
    %9 = vector.load %arg4[%c0_6, %c0_7] : memref<128x128xf32, #tpu.memory_space<vmem>>, vector<128x128xf32>
    %c0_8 = arith.constant 0 : index
    %c0_9 = arith.constant 0 : index
    %10 = vector.load %arg5[%c0_8, %c0_9] : memref<1x128xf32, #tpu.memory_space<vmem>>, vector<1x128xf32>
    %cst_10 = arith.constant dense<0.000000e+00> : vector<8x128xf32>
    %11 = tpu.matmul %8, %9, %cst_10 {dimension_numbers = #tpu.dot_dimension_numbers<[1], [0], [0], [1], [0, 0, 1, 1], [], []>} : vector<8x128xf32>, vector<128x128xf32>, vector<8x128xf32> -> vector<8x128xf32>
    %12 = vector.broadcast %10 : vector<1x128xf32> to vector<8x128xf32>
    %13 = arith.addf %11, %12 : vector<8x128xf32>
    %cst_11 = arith.constant 2.000000e-01 : f32
    %14 = vector.broadcast %cst_11 : f32 to vector<8x128xf32>
    %15 = arith.mulf %14, %13 : vector<8x128xf32>
    %16 = arith.maximumf %13, %15 : vector<8x128xf32>
    %c0_12 = arith.constant 0 : index
    %c0_13 = arith.constant 0 : index
    %17 = vector.load %arg6[%c0_12, %c0_13] : memref<128x128xf32, #tpu.memory_space<vmem>>, vector<128x128xf32>
    %c0_14 = arith.constant 0 : index
    %c0_15 = arith.constant 0 : index
    %18 = vector.load %arg7[%c0_14, %c0_15] : memref<1x128xf32, #tpu.memory_space<vmem>>, vector<1x128xf32>
    %cst_16 = arith.constant dense<0.000000e+00> : vector<8x128xf32>
    %19 = tpu.matmul %16, %17, %cst_16 {dimension_numbers = #tpu.dot_dimension_numbers<[1], [0], [0], [1], [0, 0, 1, 1], [], []>} : vector<8x128xf32>, vector<128x128xf32>, vector<8x128xf32> -> vector<8x128xf32>
    %20 = vector.broadcast %18 : vector<1x128xf32> to vector<8x128xf32>
    %21 = arith.addf %19, %20 : vector<8x128xf32>
    %c0_17 = arith.constant 0 : index
    %c0_18 = arith.constant 0 : index
    %22 = vector.load %arg8[%c0_17, %c0_18] : memref<8x128xf32, #tpu.memory_space<vmem>>, vector<8x128xf32>
    tpu.vector_store %arg8[%c0_17, %c0_18], %21 {strides = array<i32>} : memref<8x128xf32, #tpu.memory_space<vmem>>, vector<8x128xf32>,
    return
  }
  func.func @transform_0(%arg0: i32) -> (i32, i32) {
    %c0_i32 = arith.constant 0 : i32
    %c0_i32_0 = arith.constant 0 : i32
    return %arg0, %c0_i32 : i32, i32
  }
  func.func @transform_1(%arg0: i32) -> (i32, i32) {
    %c0_i32 = arith.constant 0 : i32
    %c0_i32_0 = arith.constant 0 : i32
    %c0_i32_1 = arith.constant 0 : i32
    return %c0_i32, %c0_i32_0 : i32, i32
  }
  func.func @transform_2(%arg0: i32) -> (i32, i32) {
    %c0_i32 = arith.constant 0 : i32
    %c0_i32_0 = arith.constant 0 : i32
    %c0_i32_1 = arith.constant 0 : i32
    return %c0_i32, %c0_i32_0 : i32, i32
  }
  func.func @transform_3(%arg0: i32) -> (i32, i32) {
    %c0_i32 = arith.constant 0 : i32
    %c0_i32_0 = arith.constant 0 : i32
    %c0_i32_1 = arith.constant 0 : i32
    return %c0_i32, %c0_i32_0 : i32, i32
  }
  func.func @transform_4(%arg0: i32) -> (i32, i32) {
    %c0_i32 = arith.constant 0 : i32
    %c0_i32_0 = arith.constant 0 : i32
    %c0_i32_1 = arith.constant 0 : i32
    return %c0_i32, %c0_i32_0 : i32, i32
  }
  func.func @transform_5(%arg0: i32) -> (i32, i32) {
    %c0_i32 = arith.constant 0 : i32
    %c0_i32_0 = arith.constant 0 : i32
    %c0_i32_1 = arith.constant 0 : i32
    return %c0_i32, %c0_i32_0 : i32, i32
  }
  func.func @transform_6(%arg0: i32) -> (i32, i32) {
    %c0_i32 = arith.constant 0 : i32
    %c0_i32_0 = arith.constant 0 : i32
    %c0_i32_1 = arith.constant 0 : i32
    return %c0_i32, %c0_i32_0 : i32, i32
  }
  func.func @transform_7(%arg0: i32) -> (i32, i32) {
    %c0_i32 = arith.constant 0 : i32
    %c0_i32_0 = arith.constant 0 : i32
    return %arg0, %c0_i32 : i32, i32
  }
}

</mosaic_0001>

<llo_original>
// kernel: discriminator_forward.1
$region0: #{discriminator_forward.1}
  #allocation0 [shape = 'u32[]', space=smem, size = 0x4, offset = 0x4, fixed_abs, tag = 'smem constant byte address 0x4 - core index']
  #allocation1 [shape = 'u32[144,128]{1,0:T(1,128)}', space=vmem, size = 0x12000, scoped, tag = 'internal scratch']
  %s0 = inlined_call_operand.vmem [shape: f32[8,128], index: 0, kind: input, shape index: {}]
  %s1 = inlined_call_operand.vmem [shape: f32[128,128], index: 1, kind: input, shape index: {}]
  %s2 = inlined_call_operand.vmem [shape: f32[1,128], index: 2, kind: input, shape index: {}]
  %s3 = inlined_call_operand.vmem [shape: f32[128,128], index: 3, kind: input, shape index: {}]
  %s4 = inlined_call_operand.vmem [shape: f32[1,128], index: 4, kind: input, shape index: {}]
  %s5 = inlined_call_operand.vmem [shape: f32[128,128], index: 5, kind: input, shape index: {}]
  %s6 = inlined_call_operand.vmem [shape: f32[1,128], index: 6, kind: input, shape index: {}]
  %s7 = inlined_call_operand.vmem [shape: f32[8,128], index: 7, kind: output, shape index: {}]
  %s8 = sld [smem:[#allocation0]]
  $region38: #{discriminator_forward.1} parent=0
    _
  %s10 = ssub.s32 1, %s8
  %s11 = scalar_select 0, %s10, %s8
  // Predicated region
  $region2: #{discriminator_forward.1} parent=0 // pred_check
    _
  $region3: #{discriminator_forward.1} parent=0 // pred_check_branch
    %13 = sbr.rel (0) target = $region5
  $region4: #{discriminator_forward.1} parent=0 // pred_region
    _
  $region5: #{discriminator_forward.1} parent=0 // pred_fallthru
    _
  // Predicated region
  $region6: #{discriminator_forward.1} parent=0 // pred_check
    _
  $region7: #{discriminator_forward.1} parent=0 // pred_check_branch
    %15 = sbr.rel (0) target = $region9
  $region8: #{discriminator_forward.1} parent=0 // pred_region
    _
  $region9: #{discriminator_forward.1} parent=0 // pred_fallthru
    _
  // Predicated region
  $region10: #{discriminator_forward.1} parent=0 // pred_check
    _
  $region11: #{discriminator_forward.1} parent=0 // pred_check_branch
    %17 = sbr.rel (0) target = $region13
  $region12: #{discriminator_forward.1} parent=0 // pred_region
    _
  $region13: #{discriminator_forward.1} parent=0 // pred_fallthru
    _
  // Predicated region
  $region14: #{discriminator_forward.1} parent=0 // pred_check
    _
  $region15: #{discriminator_forward.1} parent=0 // pred_check_branch
    %19 = sbr.rel (0) target = $region17
  $region16: #{discriminator_forward.1} parent=0 // pred_region
    _
  $region17: #{discriminator_forward.1} parent=0 // pred_fallthru
    _
  // Predicated region
  $region18: #{discriminator_forward.1} parent=0 // pred_check
    _
  $region19: #{discriminator_forward.1} parent=0 // pred_check_branch
    %21 = sbr.rel (0) target = $region21
  $region20: #{discriminator_forward.1} parent=0 // pred_region
    _
  $region21: #{discriminator_forward.1} parent=0 // pred_fallthru
    _
  // Predicated region
  $region22: #{discriminator_forward.1} parent=0 // pred_check
    _
  $region23: #{discriminator_forward.1} parent=0 // pred_check_branch
    %23 = sbr.rel (0) target = $region25
  $region24: #{discriminator_forward.1} parent=0 // pred_region
    _
  $region25: #{discriminator_forward.1} parent=0 // pred_fallthru
    _
  // Predicated region
  $region26: #{discriminator_forward.1} parent=0 // pred_check
    _
  $region27: #{discriminator_forward.1} parent=0 // pred_check_branch
    %25 = sbr.rel (0) target = $region29
  $region28: #{discriminator_forward.1} parent=0 // pred_region
    _
  $region29: #{discriminator_forward.1} parent=0 // pred_fallthru
    _
  %v26 = vld [vmem:[%s0] sm:$0xff]
  %v27 = vld [vmem:[%s1] sm:$0xff]
  %v28 = vld [vmem:[%s1 + $0x8] sm:$0xff]
  %v29 = vld [vmem:[%s1 + $0x10] sm:$0xff]
  %v30 = vld [vmem:[%s1 + $0x18] sm:$0xff]
  %v31 = vld [vmem:[%s1 + $0x20] sm:$0xff]
  %v32 = vld [vmem:[%s1 + $0x28] sm:$0xff]
  %v33 = vld [vmem:[%s1 + $0x30] sm:$0xff]
  %v34 = vld [vmem:[%s1 + $0x38] sm:$0xff]
  %v35 = vld [vmem:[%s1 + $0x40] sm:$0xff]
  %v36 = vld [vmem:[%s1 + $0x48] sm:$0xff]
  %v37 = vld [vmem:[%s1 + $0x50] sm:$0xff]
  %v38 = vld [vmem:[%s1 + $0x58] sm:$0xff]
  %v39 = vld [vmem:[%s1 + $0x60] sm:$0xff]
  %v40 = vld [vmem:[%s1 + $0x68] sm:$0xff]
  %v41 = vld [vmem:[%s1 + $0x70] sm:$0xff]
  %v42 = vld [vmem:[%s1 + $0x78] sm:$0xff]
  %v43 = vld [vmem:[%s2] sm:$0x1]
  %v45 = vlaneseq
  %v46 = vshrl.u32 %v45, 7
  %v47 = vsub.s32 0, %v46
  %v48 = vrot.slane %v43, %v47
  %50 = vmatprep.subr.mxu0 0.0
  %51 = vmatpush1.msra.mxu0 %v27
  %52 = vmatprep.subr.mxu0 0.0
  %53 = vmatpush1.msra.mxu0 %v28
  %54 = vmatprep.subr.mxu0 0.0
  %55 = vmatpush1.msra.mxu0 %v29
  %56 = vmatprep.subr.mxu0 0.0
  %57 = vmatpush1.msra.mxu0 %v30
  %58 = vmatprep.subr.mxu0 0.0
  %59 = vmatpush1.msra.mxu0 %v31
  %60 = vmatprep.subr.mxu0 0.0
  %61 = vmatpush1.msra.mxu0 %v32
  %62 = vmatprep.subr.mxu0 0.0
  %63 = vmatpush1.msra.mxu0 %v33
  %64 = vmatprep.subr.mxu0 0.0
  %65 = vmatpush1.msra.mxu0 %v34
  %66 = vmatprep.subr.mxu0 0.0
  %67 = vmatpush1.msra.mxu0 %v35
  %68 = vmatprep.subr.mxu0 0.0
  %69 = vmatpush1.msra.mxu0 %v36
  %70 = vmatprep.subr.mxu0 0.0
  %71 = vmatpush1.msra.mxu0 %v37
  %72 = vmatprep.subr.mxu0 0.0
  %73 = vmatpush1.msra.mxu0 %v38
  %74 = vmatprep.subr.mxu0 0.0
  %75 = vmatpush1.msra.mxu0 %v39
  %76 = vmatprep.subr.mxu0 0.0
  %77 = vmatpush1.msra.mxu0 %v40
  %78 = vmatprep.subr.mxu0 0.0
  %79 = vmatpush1.msra.mxu0 %v41
  %80 = vmatprep.subr.mxu0 0.0
  %81 = vmatpush1.msra.mxu0 %v42
  %82 = vmatprep.subr.mxu0 0.0
  %83 = vmatpush1.msra.mxu0 0.0
  %84 = vmatprep.subr.mxu0 0.0
  %85 = vmatpush1.msra.mxu0 0.0
  %86 = vmatprep.subr.mxu0 0.0
  %87 = vmatpush1.msra.mxu0 0.0
  %88 = vmatprep.subr.mxu0 0.0
  %89 = vmatpush1.msra.mxu0 0.0
  %90 = vmatprep.subr.mxu0 0.0
  %91 = vmatpush1.msra.mxu0 0.0
  %92 = vmatprep.subr.mxu0 0.0
  %93 = vmatpush1.msra.mxu0 0.0
  %94 = vmatprep.subr.mxu0 0.0
  %95 = vmatpush1.msra.mxu0 0.0
  %96 = vmatprep.subr.mxu0 0.0
  %97 = vmatpush1.msra.mxu0 0.0
  %98 = vmatprep.subr.mxu0 0.0
  %99 = vmatpush1.msra.mxu0 0.0
  %100 = vmatprep.subr.mxu0 0.0
  %101 = vmatpush1.msra.mxu0 0.0
  %102 = vmatprep.subr.mxu0 0.0
  %103 = vmatpush1.msra.mxu0 0.0
  %104 = vmatprep.subr.mxu0 0.0
  %105 = vmatpush1.msra.mxu0 0.0
  %106 = vmatprep.subr.mxu0 0.0
  %107 = vmatpush1.msra.mxu0 0.0
  %108 = vmatprep.subr.mxu0 0.0
  %109 = vmatpush1.msra.mxu0 0.0
  %110 = vmatprep.subr.mxu0 0.0
  %111 = vmatpush1.msra.mxu0 0.0
  %112 = vmatprep.subr.mxu0 0.0
  %113 = vmatpush1.msra.mxu0 0.0
  %114 = vmatprep.mubr.f32.mxu0 0.0
  %115 = vmatmul.mubr.f32.gmra.mrb[0].mxu0 %v26
  %v116 = vpop.f32.mrb[0].mxu0
  %v117 = vadd.f32 %v48, %v116
  %v118 = vpop.f32.mrb[0].mxu0
  %119 = vdwg.mxu0
  %v120 = vmul.f32 %v117, 0.2
  %v121 = vmax.f32 %v117, %v120
  %v122 = vld [vmem:[%s3] sm:$0xff]
  %v123 = vld [vmem:[%s3 + $0x8] sm:$0xff]
  %v124 = vld [vmem:[%s3 + $0x10] sm:$0xff]
  %v125 = vld [vmem:[%s3 + $0x18] sm:$0xff]
  %v126 = vld [vmem:[%s3 + $0x20] sm:$0xff]
  %v127 = vld [vmem:[%s3 + $0x28] sm:$0xff]
  %v128 = vld [vmem:[%s3 + $0x30] sm:$0xff]
  %v129 = vld [vmem:[%s3 + $0x38] sm:$0xff]
  %v130 = vld [vmem:[%s3 + $0x40] sm:$0xff]
  %v131 = vld [vmem:[%s3 + $0x48] sm:$0xff]
  %v132 = vld [vmem:[%s3 + $0x50] sm:$0xff]
  %v133 = vld [vmem:[%s3 + $0x58] sm:$0xff]
  %v134 = vld [vmem:[%s3 + $0x60] sm:$0xff]
  %v135 = vld [vmem:[%s3 + $0x68] sm:$0xff]
  %v136 = vld [vmem:[%s3 + $0x70] sm:$0xff]
  %v137 = vld [vmem:[%s3 + $0x78] sm:$0xff]
  %v138 = vld [vmem:[%s4] sm:$0x1]
  %v140 = vlaneseq
  %v141 = vshrl.u32 %v140, 7
  %v142 = vsub.s32 0, %v141
  %v143 = vrot.slane %v138, %v142
  %145 = vmatprep.subr.mxu0 0.0
  %146 = vmatpush1.msra.mxu0 %v122
  %147 = vmatprep.subr.mxu0 0.0
  %148 = vmatpush1.msra.mxu0 %v123
  %149 = vmatprep.subr.mxu0 0.0
  %150 = vmatpush1.msra.mxu0 %v124
  %151 = vmatprep.subr.mxu0 0.0
  %152 = vmatpush1.msra.mxu0 %v125
  %153 = vmatprep.subr.mxu0 0.0
  %154 = vmatpush1.msra.mxu0 %v126
  %155 = vmatprep.subr.mxu0 0.0
  %156 = vmatpush1.msra.mxu0 %v127
  %157 = vmatprep.subr.mxu0 0.0
  %158 = vmatpush1.msra.mxu0 %v128
  %159 = vmatprep.subr.mxu0 0.0
  %160 = vmatpush1.msra.mxu0 %v129
  %161 = vmatprep.subr.mxu0 0.0
  %162 = vmatpush1.msra.mxu0 %v130
  %163 = vmatprep.subr.mxu0 0.0
  %164 = vmatpush1.msra.mxu0 %v131
  %165 = vmatprep.subr.mxu0 0.0
  %166 = vmatpush1.msra.mxu0 %v132
  %167 = vmatprep.subr.mxu0 0.0
  %168 = vmatpush1.msra.mxu0 %v133
  %169 = vmatprep.subr.mxu0 0.0
  %170 = vmatpush1.msra.mxu0 %v134
  %171 = vmatprep.subr.mxu0 0.0
  %172 = vmatpush1.msra.mxu0 %v135
  %173 = vmatprep.subr.mxu0 0.0
  %174 = vmatpush1.msra.mxu0 %v136
  %175 = vmatprep.subr.mxu0 0.0
  %176 = vmatpush1.msra.mxu0 %v137
  %177 = vmatprep.subr.mxu0 0.0
  %178 = vmatpush1.msra.mxu0 0.0
  %179 = vmatprep.subr.mxu0 0.0
  %180 = vmatpush1.msra.mxu0 0.0
  %181 = vmatprep.subr.mxu0 0.0
  %182 = vmatpush1.msra.mxu0 0.0
  %183 = vmatprep.subr.mxu0 0.0
  %184 = vmatpush1.msra.mxu0 0.0
  %185 = vmatprep.subr.mxu0 0.0
  %186 = vmatpush1.msra.mxu0 0.0
  %187 = vmatprep.subr.mxu0 0.0
  %188 = vmatpush1.msra.mxu0 0.0
  %189 = vmatprep.subr.mxu0 0.0
  %190 = vmatpush1.msra.mxu0 0.0
  %191 = vmatprep.subr.mxu0 0.0
  %192 = vmatpush1.msra.mxu0 0.0
  %193 = vmatprep.subr.mxu0 0.0
  %194 = vmatpush1.msra.mxu0 0.0
  %195 = vmatprep.subr.mxu0 0.0
  %196 = vmatpush1.msra.mxu0 0.0
  %197 = vmatprep.subr.mxu0 0.0
  %198 = vmatpush1.msra.mxu0 0.0
  %199 = vmatprep.subr.mxu0 0.0
  %200 = vmatpush1.msra.mxu0 0.0
  %201 = vmatprep.subr.mxu0 0.0
  %202 = vmatpush1.msra.mxu0 0.0
  %203 = vmatprep.subr.mxu0 0.0
  %204 = vmatpush1.msra.mxu0 0.0
  %205 = vmatprep.subr.mxu0 0.0
  %206 = vmatpush1.msra.mxu0 0.0
  %207 = vmatprep.subr.mxu0 0.0
  %208 = vmatpush1.msra.mxu0 0.0
  %209 = vmatprep.mubr.f32.mxu0 0.0
  %210 = vmatmul.mubr.f32.gmra.mrb[0].mxu0 %v121
  %v211 = vpop.f32.mrb[0].mxu0
  %v212 = vadd.f32 %v143, %v211
  %v213 = vpop.f32.mrb[0].mxu0
  %214 = vdwg.mxu0
  %v215 = vmul.f32 %v212, 0.2
  %v216 = vmax.f32 %v212, %v215
  %v217 = vld [vmem:[%s5] sm:$0xff]
  %v218 = vld [vmem:[%s5 + $0x8] sm:$0xff]
  %v219 = vld [vmem:[%s5 + $0x10] sm:$0xff]
  %v220 = vld [vmem:[%s5 + $0x18] sm:$0xff]
  %v221 = vld [vmem:[%s5 + $0x20] sm:$0xff]
  %v222 = vld [vmem:[%s5 + $0x28] sm:$0xff]
  %v223 = vld [vmem:[%s5 + $0x30] sm:$0xff]
  %v224 = vld [vmem:[%s5 + $0x38] sm:$0xff]
  %v225 = vld [vmem:[%s5 + $0x40] sm:$0xff]
  %v226 = vld [vmem:[%s5 + $0x48] sm:$0xff]
  %v227 = vld [vmem:[%s5 + $0x50] sm:$0xff]
  %v228 = vld [vmem:[%s5 + $0x58] sm:$0xff]
  %v229 = vld [vmem:[%s5 + $0x60] sm:$0xff]
  %v230 = vld [vmem:[%s5 + $0x68] sm:$0xff]
  %v231 = vld [vmem:[%s5 + $0x70] sm:$0xff]
  %v232 = vld [vmem:[%s5 + $0x78] sm:$0xff]
  %v233 = vld [vmem:[%s6] sm:$0x1]
  %v235 = vlaneseq
  %v236 = vshrl.u32 %v235, 7
  %v237 = vsub.s32 0, %v236
  %v238 = vrot.slane %v233, %v237
  %240 = vmatprep.subr.mxu0 0.0
  %241 = vmatpush1.msra.mxu0 %v217
  %242 = vmatprep.subr.mxu0 0.0
  %243 = vmatpush1.msra.mxu0 %v218
  %244 = vmatprep.subr.mxu0 0.0
  %245 = vmatpush1.msra.mxu0 %v219
  %246 = vmatprep.subr.mxu0 0.0
  %247 = vmatpush1.msra.mxu0 %v220
  %248 = vmatprep.subr.mxu0 0.0
  %249 = vmatpush1.msra.mxu0 %v221
  %250 = vmatprep.subr.mxu0 0.0
  %251 = vmatpush1.msra.mxu0 %v222
  %252 = vmatprep.subr.mxu0 0.0
  %253 = vmatpush1.msra.mxu0 %v223
  %254 = vmatprep.subr.mxu0 0.0
  %255 = vmatpush1.msra.mxu0 %v224
  %256 = vmatprep.subr.mxu0 0.0
  %257 = vmatpush1.msra.mxu0 %v225
  %258 = vmatprep.subr.mxu0 0.0
  %259 = vmatpush1.msra.mxu0 %v226
  %260 = vmatprep.subr.mxu0 0.0
  %261 = vmatpush1.msra.mxu0 %v227
  %262 = vmatprep.subr.mxu0 0.0
  %263 = vmatpush1.msra.mxu0 %v228
  %264 = vmatprep.subr.mxu0 0.0
  %265 = vmatpush1.msra.mxu0 %v229
  %266 = vmatprep.subr.mxu0 0.0
  %267 = vmatpush1.msra.mxu0 %v230
  %268 = vmatprep.subr.mxu0 0.0
  %269 = vmatpush1.msra.mxu0 %v231
  %270 = vmatprep.subr.mxu0 0.0
  %271 = vmatpush1.msra.mxu0 %v232
  %272 = vmatprep.subr.mxu0 0.0
  %273 = vmatpush1.msra.mxu0 0.0
  %274 = vmatprep.subr.mxu0 0.0
  %275 = vmatpush1.msra.mxu0 0.0
  %276 = vmatprep.subr.mxu0 0.0
  %277 = vmatpush1.msra.mxu0 0.0
  %278 = vmatprep.subr.mxu0 0.0
  %279 = vmatpush1.msra.mxu0 0.0
  %280 = vmatprep.subr.mxu0 0.0
  %281 = vmatpush1.msra.mxu0 0.0
  %282 = vmatprep.subr.mxu0 0.0
  %283 = vmatpush1.msra.mxu0 0.0
  %284 = vmatprep.subr.mxu0 0.0
  %285 = vmatpush1.msra.mxu0 0.0
  %286 = vmatprep.subr.mxu0 0.0
  %287 = vmatpush1.msra.mxu0 0.0
  %288 = vmatprep.subr.mxu0 0.0
  %289 = vmatpush1.msra.mxu0 0.0
  %290 = vmatprep.subr.mxu0 0.0
  %291 = vmatpush1.msra.mxu0 0.0
  %292 = vmatprep.subr.mxu0 0.0
  %293 = vmatpush1.msra.mxu0 0.0
  %294 = vmatprep.subr.mxu0 0.0
  %295 = vmatpush1.msra.mxu0 0.0
  %296 = vmatprep.subr.mxu0 0.0
  %297 = vmatpush1.msra.mxu0 0.0
  %298 = vmatprep.subr.mxu0 0.0
  %299 = vmatpush1.msra.mxu0 0.0
  %300 = vmatprep.subr.mxu0 0.0
  %301 = vmatpush1.msra.mxu0 0.0
  %302 = vmatprep.subr.mxu0 0.0
  %303 = vmatpush1.msra.mxu0 0.0
  %304 = vmatprep.mubr.f32.mxu0 0.0
  %305 = vmatmul.mubr.f32.gmra.mrb[0].mxu0 %v216
  %v306 = vpop.f32.mrb[0].mxu0
  %v307 = vadd.f32 %v238, %v306
  %v308 = vpop.f32.mrb[0].mxu0
  %309 = vdwg.mxu0
  %310 = vst [vmem:[%s7] sm:$0xff] %v307
  // Predicated region
  $region30: #{discriminator_forward.1} parent=0 // pred_check
    _
  $region31: #{discriminator_forward.1} parent=0 // pred_check_branch
    %312 = sbr.rel (0) target = $region33
  $region32: #{discriminator_forward.1} parent=0 // pred_region
    _
  $region33: #{discriminator_forward.1} parent=0 // pred_fallthru
    _
  // Predicated region
  $region34: #{discriminator_forward.1} parent=0 // pred_check
    _
  $region35: #{discriminator_forward.1} parent=0 // pred_check_branch
    %314 = sbr.rel (0) target = $region37
  $region36: #{discriminator_forward.1} parent=0 // pred_region
    _
  $region37: #{discriminator_forward.1} parent=0 // pred_fallthru
    _

</llo_original>
